<compile_context>
chip_gen: v6e
topology: v6e:2x2x1
jax: 0.10.0
libtpu: 0.0.40
codegen_flags: <defaults>
</compile_context>

<pallas_src>
import functools

import jax
import jax.numpy as jnp
from jax.experimental import pallas as pl
from jax.experimental.pallas import tpu as pltpu


def _round_up(n, m):
    return ((n + m - 1) // m) * m


def _pick_batch_tile(batch, f_in, f_pad, max_tile=512,
                     budget_bytes=20 * 1024 * 1024):
    """Largest batch tile (multiple of 8, <= max_tile) fitting a VMEM budget.

    Per-row streams (x, eps, fused z|mu|lv output) are double-buffered by the
    pipeline; the fused weight/bias block is resident (counted x2 conservatively).
    """
    per_row = 2 * (f_in + f_pad + 3 * f_pad) * 4          # f32 bytes / batch row
    resident = 2 * (f_in * 2 * f_pad + 2 * f_pad) * 4     # fused W + b
    tb = (budget_bytes - resident) // per_row
    tb = max(8, min(tb, batch, max_tile))
    return max(8, (tb // 8) * 8)


def gaussian_sample_kernel(x_ref, w_ref, b_ref, eps_ref, out_ref, *, f_pad):
    x = x_ref[...]

    # One fused MXU matmul: y = x @ [W_mu | W_lv] + [b_mu | b_lv]  (f32 accumulate)
    y = jnp.dot(x, w_ref[...], preferred_element_type=jnp.float32) + b_ref[...]

    mu = y[:, :f_pad]
    lv = y[:, f_pad:2 * f_pad]

    # Reparametrization: z = mu + exp(0.5 * log_var) * eps   (EUP exp + VPU FMA, f32)
    z = mu + jnp.exp(0.5 * lv) * eps_ref[...]

    # Single lane-dense output slab: [ z | mu | lv ], 128-aligned column slices.
    out_ref[:, 0:f_pad] = z.astype(out_ref.dtype)
    out_ref[:, f_pad:2 * f_pad] = mu.astype(out_ref.dtype)
    out_ref[:, 2 * f_pad:3 * f_pad] = lv.astype(out_ref.dtype)


def gaussian_sample(x, w_mu, b_mu, w_lv, b_lv, eps, *, max_batch_tile=512):
    """x: [B, F_in]; w_*: [F_in, F_out]; b_*: [1, F_out]; eps: [B, F_out].

    Returns (z, mu, log_var), each [B, F_out] float32.
    """
    B, F_in = x.shape
    F_out = w_mu.shape[1]
    F_pad = _round_up(F_out, 128)          # lane-dense output width

    def pad_cols(a, target):
        extra = target - a.shape[-1]
        return jnp.pad(a, ((0, 0), (0, extra))) if extra else a

    # Fuse + pad parameters: W_cat [F_in, 2*F_pad], b_cat [1, 2*F_pad].
    w_cat = jnp.concatenate([pad_cols(w_mu, F_pad), pad_cols(w_lv, F_pad)], axis=-1)
    b_cat = jnp.concatenate([pad_cols(b_mu, F_pad), pad_cols(b_lv, F_pad)], axis=-1)
    eps_p = pad_cols(eps, F_pad)

    TB = _pick_batch_tile(B, F_in, F_pad, max_tile=max_batch_tile)
    B_pad = _round_up(B, TB)
    if B_pad != B:
        x = jnp.pad(x, ((0, B_pad - B), (0, 0)))
        eps_p = jnp.pad(eps_p, ((0, B_pad - B), (0, 0)))

    grid = (B_pad // TB,)

    # TODO(synk): add a K ("arbitrary") reduction grid axis + VMEM accumulator if
    # F_in ever grows too large for the fused weight to stay resident in VMEM.

    flops = 2 * B_pad * F_in * (2 * F_pad) + 4 * B_pad * F_pad
    bytes_accessed = (B_pad * F_in + B_pad * F_pad + F_in * 2 * F_pad
                      + 2 * F_pad + B_pad * 3 * F_pad) * 4

    out = pl.pallas_call(
        functools.partial(gaussian_sample_kernel, f_pad=F_pad),
        out_shape=jax.ShapeDtypeStruct((B_pad, 3 * F_pad), jnp.float32),
        grid=grid,
        in_specs=[
            pl.BlockSpec((TB, F_in), lambda i: (i, 0)),           # x tile
            pl.BlockSpec((F_in, 2 * F_pad), lambda i: (0, 0)),    # fused weight (resident)
            pl.BlockSpec((1, 2 * F_pad), lambda i: (0, 0)),       # fused bias (resident)
            pl.BlockSpec((TB, F_pad), lambda i: (i, 0)),          # eps tile
        ],
        out_specs=pl.BlockSpec((TB, 3 * F_pad), lambda i: (i, 0)),
        compiler_params=pltpu.CompilerParams(
            dimension_semantics=("parallel",),
            vmem_limit_bytes=32 * 1024 * 1024,
        ),
        cost_estimate=pl.CostEstimate(
            flops=int(flops),
            transcendentals=int(B_pad * F_pad),
            bytes_accessed=int(bytes_accessed),
        ),
    )(x, w_cat, b_cat, eps_p)

    z = out[:B, 0:F_out]
    mu = out[:B, F_pad:F_pad + F_out]
    lv = out[:B, 2 * F_pad:2 * F_pad + F_out]
    return z, mu, lv


def init_linear_params(key, in_features, out_features):
    """Deterministic init mimicking nn.Linear default (uniform +-1/sqrt(fan_in)).
    Returned weight is already transposed to [F_in, F_out]."""
    kw, kb = jax.random.split(key)
    bound = 1.0 / jnp.sqrt(jnp.float32(in_features))
    w = jax.random.uniform(kw, (in_features, out_features), jnp.float32,
                           minval=-bound, maxval=bound)
    b = jax.random.uniform(kb, (1, out_features), jnp.float32,
                           minval=-bound, maxval=bound)
    return w, b


if __name__ == "__main__":
    # Small shapes; B chosen so the grid has >1 step and a padded final tile
    # (exercises the pipelined + row-padded paths).
    B, F_in, F_out = 40, 32, 16

    key = jax.random.PRNGKey(0)
    k_x, k_mu, k_lv, k_eps = jax.random.split(key, 4)

    x = jax.random.normal(k_x, (B, F_in), jnp.float32)
    w_mu, b_mu = init_linear_params(k_mu, F_in, F_out)
    w_lv, b_lv = init_linear_params(k_lv, F_in, F_out)
    # epsilon drawn outside the kernel so the sample is deterministic/reproducible
    eps = jax.random.normal(k_eps, (B, F_out), jnp.float32)

    z, mu, lv = gaussian_sample(x, w_mu, b_mu, w_lv, b_lv, eps, max_batch_tile=16)
    jax.block_until_ready((z, mu, lv))

    # pure-JAX reference check
    mu_ref = x @ w_mu + b_mu
    lv_ref = x @ w_lv + b_lv
    z_ref = mu_ref + jnp.exp(0.5 * lv_ref) * eps
    assert jnp.allclose(mu, mu_ref, atol=1e-5, rtol=1e-5)
    assert jnp.allclose(lv, lv_ref, atol=1e-5, rtol=1e-5)
    assert jnp.allclose(z, z_ref, atol=1e-5, rtol=1e-5)

    print("KERNEL_OK")
</pallas_src>

<mosaic_0001>
module attributes {stable_mosaic.version = 11 : i64} {
  func.func @gaussian_sample_kernel(%arg0: i32, %arg1: memref<16x32xf32, #tpu.memory_space<vmem>>, %arg2: memref<32x256xf32, #tpu.memory_space<vmem>>, %arg3: memref<1x256xf32, #tpu.memory_space<vmem>>, %arg4: memref<16x128xf32, #tpu.memory_space<vmem>>, %arg5: memref<16x384xf32, #tpu.memory_space<vmem>>) attributes {dimension_semantics = [#tpu.dimension_semantics<parallel>], iteration_bounds = array<i64: 3>, scalar_prefetch = 0 : i64, scratch_operands = 0 : i64, tpu.core_type = #tpu.core_type<tc>, window_params = [{transform_indices = @transform_0, window_bounds = array<i64: 16, 32>}, {pipeline_mode = #tpu.pipeline_mode<synchronous>, transform_indices = @transform_1, window_bounds = array<i64: 32, 256>}, {pipeline_mode = #tpu.pipeline_mode<synchronous>, transform_indices = @transform_2, window_bounds = array<i64: 1, 256>}, {transform_indices = @transform_3, window_bounds = array<i64: 16, 128>}, {transform_indices = @transform_4, window_bounds = array<i64: 16, 384>}]} {
    %c0 = arith.constant 0 : index
    %c0_0 = arith.constant 0 : index
    %0 = vector.load %arg1[%c0, %c0_0] : memref<16x32xf32, #tpu.memory_space<vmem>>, vector<16x32xf32>
    %c0_1 = arith.constant 0 : index
    %c0_2 = arith.constant 0 : index
    %1 = vector.load %arg2[%c0_1, %c0_2] : memref<32x256xf32, #tpu.memory_space<vmem>>, vector<32x256xf32>
    %cst = arith.constant dense<0.000000e+00> : vector<16x256xf32>
    %2 = tpu.matmul %0, %1, %cst {dimension_numbers = #tpu.dot_dimension_numbers<[1], [0], [0], [1], [0, 0, 1, 1], [], []>} : vector<16x32xf32>, vector<32x256xf32>, vector<16x256xf32> -> vector<16x256xf32>
    %c0_3 = arith.constant 0 : index
    %c0_4 = arith.constant 0 : index
    %3 = vector.load %arg3[%c0_3, %c0_4] : memref<1x256xf32, #tpu.memory_space<vmem>>, vector<1x256xf32>
    %4 = vector.broadcast %3 : vector<1x256xf32> to vector<16x256xf32>
    %5 = arith.addf %2, %4 : vector<16x256xf32>
    %6 = vector.extract_strided_slice %5 {offsets = [0, 0], sizes = [16, 128], strides = [1, 1]} : vector<16x256xf32> to vector<16x128xf32>
    %7 = vector.extract_strided_slice %5 {offsets = [0, 128], sizes = [16, 128], strides = [1, 1]} : vector<16x256xf32> to vector<16x128xf32>
    %cst_5 = arith.constant 5.000000e-01 : f32
    %8 = vector.broadcast %cst_5 : f32 to vector<16x128xf32>
    %9 = arith.mulf %8, %7 : vector<16x128xf32>
    %10 = math.exp %9 : vector<16x128xf32>
    %c0_6 = arith.constant 0 : index
    %c0_7 = arith.constant 0 : index
    %11 = vector.load %arg4[%c0_6, %c0_7] : memref<16x128xf32, #tpu.memory_space<vmem>>, vector<16x128xf32>
    %12 = arith.mulf %10, %11 : vector<16x128xf32>
    %13 = arith.addf %6, %12 : vector<16x128xf32>
    %c0_8 = arith.constant 0 : index
    %c0_9 = arith.constant 0 : index
    %14 = vector.load %arg5[%c0_8, %c0_9] : memref<16x384xf32, #tpu.memory_space<vmem>>, vector<16x128xf32>
    tpu.vector_store %arg5[%c0_8, %c0_9], %13 {strides = array<i32>} : memref<16x384xf32, #tpu.memory_space<vmem>>, vector<16x128xf32>,
    %c0_10 = arith.constant 0 : index
    %c128 = arith.constant 128 : index
    %15 = vector.load %arg5[%c0_10, %c128] : memref<16x384xf32, #tpu.memory_space<vmem>>, vector<16x128xf32>
    tpu.vector_store %arg5[%c0_10, %c128], %6 {strides = array<i32>} : memref<16x384xf32, #tpu.memory_space<vmem>>, vector<16x128xf32>,
    %c0_11 = arith.constant 0 : index
    %c256 = arith.constant 256 : index
    %16 = vector.load %arg5[%c0_11, %c256] : memref<16x384xf32, #tpu.memory_space<vmem>>, vector<16x128xf32>
    tpu.vector_store %arg5[%c0_11, %c256], %7 {strides = array<i32>} : memref<16x384xf32, #tpu.memory_space<vmem>>, vector<16x128xf32>,
    return
  }
  func.func @transform_0(%arg0: i32) -> (i32, i32) {
    %c0_i32 = arith.constant 0 : i32
    %c0_i32_0 = arith.constant 0 : i32
    return %arg0, %c0_i32 : i32, i32
  }
  func.func @transform_1(%arg0: i32) -> (i32, i32) {
    %c0_i32 = arith.constant 0 : i32
    %c0_i32_0 = arith.constant 0 : i32
    %c0_i32_1 = arith.constant 0 : i32
    return %c0_i32, %c0_i32_0 : i32, i32
  }
  func.func @transform_2(%arg0: i32) -> (i32, i32) {
    %c0_i32 = arith.constant 0 : i32
    %c0_i32_0 = arith.constant 0 : i32
    %c0_i32_1 = arith.constant 0 : i32
    return %c0_i32, %c0_i32_0 : i32, i32
  }
  func.func @transform_3(%arg0: i32) -> (i32, i32) {
    %c0_i32 = arith.constant 0 : i32
    %c0_i32_0 = arith.constant 0 : i32
    return %arg0, %c0_i32 : i32, i32
  }
  func.func @transform_4(%arg0: i32) -> (i32, i32) {
    %c0_i32 = arith.constant 0 : i32
    %c0_i32_0 = arith.constant 0 : i32
    return %arg0, %c0_i32 : i32, i32
  }
}

</mosaic_0001>

<llo_original>
// kernel: tpu_custom_call.1
$region0: #{tpu_custom_call.1}
  #allocation0 [shape = 'u32[]', space=smem, size = 0x4, offset = 0x4, fixed_abs, tag = 'smem constant byte address 0x4 - core index']
  #allocation1 [shape = 'u32[144,128]{1,0:T(1,128)}', space=vmem, size = 0x12000, scoped, tag = 'internal scratch']
  %s0 = inlined_call_operand.vmem [shape: f32[48,32], index: 0, kind: input, shape index: {}]
  %s1 = inlined_call_operand.vmem [shape: f32[32,256], index: 1, kind: input, shape index: {}]
  %s2 = inlined_call_operand.vmem [shape: f32[1,256], index: 2, kind: input, shape index: {}]
  %s3 = inlined_call_operand.hbm [shape: f32[48,128], index: 3, kind: input, shape index: {}]
  %s4 = inlined_call_operand.hbm [shape: f32[48,384], index: 4, kind: output, shape index: {}]
  %s5 = sld [smem:[#allocation0]]
  $region53: #{tpu_custom_call.1} parent=0
    _
  %s7 = ssub.s32 1, %s5
  %s8 = scalar_select 0, %s7, %s5
  $region1: #{tpu_custom_call.1} parent=0
    #allocation2 [shape = 'u8[16384]{0}', space=vmem, size = 0x4000, scoped, tag = 'input window, operand 3']
    #allocation3 [shape = 's32[2]{0}', space=sflag, size = 0x8, scoped, tag = 'scoped memory for tpu_custom_call.1']
    #allocation4 [shape = 's32[2]{0}', space=sflag, size = 0x8, scoped, tag = 'scoped memory for tpu_custom_call.1']
    #allocation5 [shape = 'u8[49152]{0}', space=vmem, size = 0xc000, scoped, tag = 'output window, operand 0']
    %9 = vsyncpa [#allocation3], 0
    %s10 = scalar_lea.sflag [#allocation3], 1
    %11 = vsyncpa %s10, 0
    %12 = vsyncpa [#allocation4], 0
    %s13 = scalar_lea.sflag [#allocation4], 1
    %14 = vsyncpa %s13, 0
    loop: start=0, step=1, limit=5
    $region2: #{tpu_custom_call.1} parent=1 // loop_pre_header
      _
    $region3: #{tpu_custom_call.1} parent=1 // loop_header
      %s16 = sphi 0, %s20
      %p17 = scmp.ge.s32.totalorder %s16, 5
      %s26 = sphi 0, %s28
      %s29 = sphi 0, %s26
      %s30 = sphi 0, %s29
      %s46 = sphi 0, %s30
      %s50 = sphi 0, %s50
      %s52 = sphi 0, %s50
      %s53 = sphi 0, %s52
      %s67 = sphi 0, %s53
      %s71 = sphi 0, %s71
      %s73 = sphi 0, %s71
      %s74 = sphi 0, %s73
      %s88 = sphi 0, %s74
      %s94 = sphi 0, %s96
      %s97 = sphi 0, %s94
      %s98 = sphi 0, %s97
      %s114 = sphi 0, %s98
      %s120 = sphi 0, %s122
      %s123 = sphi 0, %s120
      %s124 = sphi 0, %s123
      %s140 = sphi 0, %s124
    $region4: #{tpu_custom_call.1} parent=1 // loop_header_branch
      %19 = sbr.rel (%p17) target = $region8
    $region5: #{tpu_custom_call.1} parent=1 // loop_body
      %s21 = ssub.s32 %s16, 1
      %s22 = ssub.s32 %s16, 2
      %s23 = sadd.s32 %s16, 1
      %s24 = ssub.s32 %s16, %s23
      %p25 = scmp.eq.s32.totalorder %s24, 0
      %s27 = sadd.s32 %s26, 1
      %s28 = scalar_select %p25, %s26, %s27
      %p31 = pneg %p25
      %p32 = scmp.eq.s32.totalorder %s16, 2
      %p33 = por %p31, %p32
      %p34 = scmp.ne.s32.totalorder %s26, %s29
      %p35 = scmp.eq.s32.totalorder %s16, 0
      %p36 = por %p34, %p35
      %p37 = scmp.ne.s32.totalorder %s26, %s29
      %p38 = scmp.eq.s32.totalorder %s21, 2
      %p39 = por %p37, %p38
      %p40 = scmp.ne.s32.totalorder %s29, %s30
      %p41 = scmp.eq.s32.totalorder %s21, 0
      %p42 = por %p40, %p41
      %p43 = scmp.ne.s32.totalorder %s29, %s30
      %p44 = scmp.eq.s32.totalorder %s22, 2
      %p45 = por %p43, %p44
      %p47 = scmp.ne.s32.totalorder %s30, %s46
      %p48 = scmp.eq.s32.totalorder %s22, 0
      %p49 = por %p47, %p48
      %s51 = sadd.s32 %s50, 1
      %p54 = scmp.eq.s32.totalorder %s16, 2
      %p55 = scmp.ne.s32.totalorder %s50, %s52
      %p56 = scmp.eq.s32.totalorder %s16, 0
      %p57 = por %p55, %p56
      %p58 = scmp.ne.s32.totalorder %s50, %s52
      %p59 = scmp.eq.s32.totalorder %s21, 2
      %p60 = por %p58, %p59
      %p61 = scmp.ne.s32.totalorder %s52, %s53
      %p62 = scmp.eq.s32.totalorder %s21, 0
      %p63 = por %p61, %p62
      %p64 = scmp.ne.s32.totalorder %s52, %s53
      %p65 = scmp.eq.s32.totalorder %s22, 2
      %p66 = por %p64, %p65
      %p68 = scmp.ne.s32.totalorder %s53, %s67
      %p69 = scmp.eq.s32.totalorder %s22, 0
      %p70 = por %p68, %p69
      %s72 = sadd.s32 %s71, 1
      %p75 = scmp.eq.s32.totalorder %s16, 2
      %p76 = scmp.ne.s32.totalorder %s71, %s73
      %p77 = scmp.eq.s32.totalorder %s16, 0
      %p78 = por %p76, %p77
      %p79 = scmp.ne.s32.totalorder %s71, %s73
      %p80 = scmp.eq.s32.totalorder %s21, 2
      %p81 = por %p79, %p80
      %p82 = scmp.ne.s32.totalorder %s73, %s74
      %p83 = scmp.eq.s32.totalorder %s21, 0
      %p84 = por %p82, %p83
      %p85 = scmp.ne.s32.totalorder %s73, %s74
      %p86 = scmp.eq.s32.totalorder %s22, 2
      %p87 = por %p85, %p86
      %p89 = scmp.ne.s32.totalorder %s74, %s88
      %p90 = scmp.eq.s32.totalorder %s22, 0
      %p91 = por %p89, %p90
      %s92 = ssub.s32 %s16, %s23
      %p93 = scmp.eq.s32.totalorder %s92, 0
      %s95 = sadd.s32 %s94, 1
      %s96 = scalar_select %p93, %s94, %s95
      %p99 = pneg %p93
      %p100 = scmp.eq.s32.totalorder %s16, 2
      %p101 = por %p99, %p100
      %p102 = scmp.ne.s32.totalorder %s94, %s97
      %p103 = scmp.eq.s32.totalorder %s16, 0
      %p104 = por %p102, %p103
      %p105 = scmp.ne.s32.totalorder %s94, %s97
      %p106 = scmp.eq.s32.totalorder %s21, 2
      %p107 = por %p105, %p106
      %p108 = scmp.ne.s32.totalorder %s97, %s98
      %p109 = scmp.eq.s32.totalorder %s21, 0
      %p110 = por %p108, %p109
      %p111 = scmp.ne.s32.totalorder %s97, %s98
      %p112 = scmp.eq.s32.totalorder %s22, 2
      %p113 = por %p111, %p112
      %p115 = scmp.ne.s32.totalorder %s98, %s114
      %p116 = scmp.eq.s32.totalorder %s22, 0
      %p117 = por %p115, %p116
      %s118 = ssub.s32 %s16, %s23
      %p119 = scmp.eq.s32.totalorder %s118, 0
      %s121 = sadd.s32 %s120, 1
      %s122 = scalar_select %p119, %s120, %s121
      %p125 = pneg %p119
      %p126 = scmp.eq.s32.totalorder %s16, 2
      %p127 = por %p125, %p126
      %p128 = scmp.ne.s32.totalorder %s120, %s123
      %p129 = scmp.eq.s32.totalorder %s16, 0
      %p130 = por %p128, %p129
      %p131 = scmp.ne.s32.totalorder %s120, %s123
      %p132 = scmp.eq.s32.totalorder %s21, 2
      %p133 = por %p131, %p132
      %p134 = scmp.ne.s32.totalorder %s123, %s124
      %p135 = scmp.eq.s32.totalorder %s21, 0
      %p136 = por %p134, %p135
      %p137 = scmp.ne.s32.totalorder %s123, %s124
      %p138 = scmp.eq.s32.totalorder %s22, 2
      %p139 = por %p137, %p138
      %p141 = scmp.ne.s32.totalorder %s124, %s140
      %p142 = scmp.eq.s32.totalorder %s22, 0
      %p143 = por %p141, %p142
      %p144 = scmp.le.s32.totalorder 1, %s16
      %p145 = scmp.lt.s32.totalorder %s16, 4
      %p146 = pnand %p144, %p145
      %p147 = pneg %p146
      // Predicated region
      $region9: #{tpu_custom_call.1} parent=5 // pred_check
        _
      $region10: #{tpu_custom_call.1} parent=5 // pred_check_branch
        %149 = sbr.rel (%p146) target = $region12
      $region11: #{tpu_custom_call.1} parent=5 // pred_region
        %s150 = ssub.s32 %s16, 1
        // Predicated region
        $region13: #{tpu_custom_call.1} parent=11 // pred_check
          %p151 = pneg %p63
        $region14: #{tpu_custom_call.1} parent=11 // pred_check_branch
          %153 = sbr.rel (%p151) target = $region16
        $region15: #{tpu_custom_call.1} parent=11 // pred_region
          _
        $region16: #{tpu_custom_call.1} parent=11 // pred_fallthru
          _
        // Predicated region
        $region17: #{tpu_custom_call.1} parent=11 // pred_check
          %p154 = pneg %p84
        $region18: #{tpu_custom_call.1} parent=11 // pred_check_branch
          %156 = sbr.rel (%p154) target = $region20
        $region19: #{tpu_custom_call.1} parent=11 // pred_region
          _
        $region20: #{tpu_custom_call.1} parent=11 // pred_fallthru
          _
      $region12: #{tpu_custom_call.1} parent=5 // pred_fallthru
        _
      %p157 = scmp.lt.s32.totalorder %s16, 3
      // Predicated region
      $region21: #{tpu_custom_call.1} parent=5 // pred_check
        %p158 = pneg %p157
      $region22: #{tpu_custom_call.1} parent=5 // pred_check_branch
        %160 = sbr.rel (%p158) target = $region24
      $region23: #{tpu_custom_call.1} parent=5 // pred_region
        // Predicated region
        $region25: #{tpu_custom_call.1} parent=23 // pred_check
          %p161 = pneg %p36
        $region26: #{tpu_custom_call.1} parent=23 // pred_check_branch
          %163 = sbr.rel (%p161) target = $region28
        $region27: #{tpu_custom_call.1} parent=23 // pred_region
          %s164 = smul.u32 2, %s16
          %p165 = scmp.lt.s32.totalorder %s164, 5
          %s166 = scalar_select %p165, %s164, 5
          %s167 = smul.addr %s166, 8
          %s168 = scalar_lea.vmem %s0, %s167
          %s169 = smul.u32 2, %s16
        $region28: #{tpu_custom_call.1} parent=23 // pred_fallthru
          _
        // Predicated region
        $region29: #{tpu_custom_call.1} parent=23 // pred_check
          %p170 = pneg %p104
        $region30: #{tpu_custom_call.1} parent=23 // pred_check_branch
          %172 = sbr.rel (%p170) target = $region32
        $region31: #{tpu_custom_call.1} parent=23 // pred_region
          %s173 = sand.u32 %s94, 1
          %s174 = scalar_lea.sflag [#allocation3], %s173
          %s175 = sand.u32 %s94, 1
          %s176 = smul.addr %s175, 16
          %s177 = scalar_lea.vmem [#allocation2], %s176
          %s178 = smul.u32 2, %s16
          %s180 = ssub.s32 256, 256
          %181 = vsyncadd %s174, %s180
          %s182 = smul.addr %s178, 128
          %s183 = scalar_lea.hbm %s3, %s182
          %s184 = sshll.u32 %s177, 4
          %s185 = int_to_ptr.vmem [resolvable:$true] %s184
          %190 = dma.hbm_to_vmem [thread:$0]  %s183, 256, %s185, %s174, 128, 128, 8
        $region32: #{tpu_custom_call.1} parent=23 // pred_fallthru
          _
      $region24: #{tpu_custom_call.1} parent=5 // pred_fallthru
        _
      %p191 = scmp.le.s32.totalorder 1, %s16
      %p192 = scmp.lt.s32.totalorder %s16, 4
      %p193 = pnand %p191, %p192
      %p194 = pneg %p193
      // Predicated region
      $region33: #{tpu_custom_call.1} parent=5 // pred_check
        _
      $region34: #{tpu_custom_call.1} parent=5 // pred_check_branch
        %196 = sbr.rel (%p193) target = $region36
      $region35: #{tpu_custom_call.1} parent=5 // pred_region
        %s197 = ssub.s32 %s16, 1
        %s198 = sand.u32 %s97, 1
        %s199 = scalar_lea.sflag [#allocation3], %s198
        %s200 = sand.u32 %s97, 1
        %s201 = smul.addr %s200, 16
        %s202 = scalar_lea.vmem [#allocation2], %s201
        // Predicated region
        $region37: #{tpu_custom_call.1} parent=35 // pred_check
          %p203 = pneg %p110
        $region38: #{tpu_custom_call.1} parent=35 // pred_check_branch
          %205 = sbr.rel (%p203) target = $region40
        $region39: #{tpu_custom_call.1} parent=35 // pred_region
          %206 = dma.done %s199, 256
        $region40: #{tpu_custom_call.1} parent=35 // pred_fallthru
          _
        %s207 = smul.u32 2, %s21
        %p208 = scmp.lt.s32.totalorder %s207, 5
        %s209 = scalar_select %p208, %s207, 5
        %s210 = smul.addr %s209, 8
        %s211 = scalar_lea.vmem %s0, %s210
        %p212 = pneg %p42
        %p213 = pneg %p39
        %p214 = pneg %p63
        %p215 = pneg %p60
        %p216 = pneg %p84
        %p217 = pneg %p81
        %s218 = sand.u32 %s97, 1
        %s219 = scalar_lea.sflag [#allocation3], %s218
        %s220 = sand.u32 %s97, 1
        %s221 = smul.addr %s220, 16
        %s222 = scalar_lea.vmem [#allocation2], %s221
        %p223 = pneg %p110
        %p224 = pneg %p107
        %p225 = pneg %p136
        %p226 = pneg %p133
        %s227 = sand.u32 %s123, 1
        %s228 = scalar_lea.sflag [#allocation4], %s227
        %s229 = sand.u32 %s123, 1
        %s230 = smul.addr %s229, 48
        %s231 = scalar_lea.vmem [#allocation5], %s230
        %s232 = smul.u32 2, %s21
        %p233 = scmp.lt.s32.totalorder %s232, 5
        %s234 = scalar_select %p233, %s232, 5
        %s235 = smul.addr %s234, 8
        %s236 = scalar_lea.vmem %s0, %s235
        %s237 = smul.u32 2, %s21
        %s238 = smul.u32 2, %s21
        %s239 = smul.u32 2, %s21
        %v240 = vld [vmem:[%s236] sm:$0xff]
        %v241 = vld [vmem:[%s236 + $0x8] sm:$0xff]
        %v242 = vld [vmem:[%s1] sm:$0xff]
        %v243 = vld [vmem:[%s1 + $0x8] sm:$0xff]
        %v244 = vld [vmem:[%s1 + $0x10] sm:$0xff]
        %v245 = vld [vmem:[%s1 + $0x18] sm:$0xff]
        %v246 = vld [vmem:[%s1 + $0x20] sm:$0xff]
        %v247 = vld [vmem:[%s1 + $0x28] sm:$0xff]
        %v248 = vld [vmem:[%s1 + $0x30] sm:$0xff]
        %v249 = vld [vmem:[%s1 + $0x38] sm:$0xff]
        %v250 = vld [vmem:[%s2] sm:$0x3]
        %v252 = vlaneseq
        %v253 = vshrl.u32 %v252, 7
        %v254 = vsub.s32 0, %v253
        %v255 = vrot.slane %v250, %v254
        %v256 = vlaneseq
        %v257 = vshrl.u32 %v256, 7
        %v258 = vsub.s32 1, %v257
        %v259 = vrot.slane %v250, %v258
        %vm262 = vcmask 261120
        %v264 = vsel %vm262, %v240, 0
        %v267 = vsel %vm262, %v241, 0
        %269 = vmatprep.subr.mxu0 0.0
        %270 = vmatpush1.msra.mxu0 0.0
        %271 = vmatprep.subr.mxu0 0.0
        %272 = vmatpush1.msra.mxu0 0.0
        %273 = vmatprep.subr.mxu0 0.0
        %274 = vmatpush1.msra.mxu0 0.0
        %275 = vmatprep.subr.mxu0 0.0
        %276 = vmatpush1.msra.mxu0 0.0
        %277 = vmatprep.subr.mxu0 0.0
        %278 = vmatpush1.msra.mxu0 0.0
        %279 = vmatprep.subr.mxu0 0.0
        %280 = vmatpush1.msra.mxu0 0.0
        %281 = vmatprep.subr.mxu0 0.0
        %282 = vmatpush1.msra.mxu0 0.0
        %283 = vmatprep.subr.mxu0 0.0
        %284 = vmatpush1.msra.mxu0 0.0
        %285 = vmatprep.subr.mxu0 0.0
        %286 = vmatpush1.msra.mxu0 0.0
        %287 = vmatprep.subr.mxu0 0.0
        %288 = vmatpush1.msra.mxu0 0.0
        %289 = vmatprep.subr.mxu0 0.0
        %290 = vmatpush1.msra.mxu0 0.0
        %291 = vmatprep.subr.mxu0 0.0
        %292 = vmatpush1.msra.mxu0 0.0
        %293 = vmatprep.subr.mxu0 %v249
        %294 = vmatpush1.msra.mxu0 %v248
        %295 = vmatprep.subr.mxu0 %v247
        %296 = vmatpush1.msra.mxu0 %v246
        %297 = vmatprep.subr.mxu0 %v245
        %298 = vmatpush1.msra.mxu0 %v244
        %299 = vmatprep.subr.mxu0 %v243
        %300 = vmatpush1.msra.mxu0 %v242
        %301 = vmatprep.subr.mxu0 0.0
        %302 = vmatpush2.msra.mxu0 0.0
        %303 = vmatprep.subr.mxu0 0.0
        %304 = vmatpush2.msra.mxu0 0.0
        %305 = vmatprep.subr.mxu0 0.0
        %306 = vmatpush2.msra.mxu0 0.0
        %307 = vmatprep.subr.mxu0 0.0
        %308 = vmatpush2.msra.mxu0 0.0
        %309 = vmatprep.subr.mxu0 0.0
        %310 = vmatpush2.msra.mxu0 0.0
        %311 = vmatprep.subr.mxu0 0.0
        %312 = vmatpush2.msra.mxu0 0.0
        %313 = vmatprep.subr.mxu0 0.0
        %314 = vmatpush2.msra.mxu0 0.0
        %315 = vmatprep.subr.mxu0 0.0
        %316 = vmatpush2.msra.mxu0 0.0
        %317 = vmatprep.subr.mxu0 0.0
        %318 = vmatpush2.msra.mxu0 0.0
        %319 = vmatprep.subr.mxu0 0.0
        %320 = vmatpush2.msra.mxu0 0.0
        %321 = vmatprep.subr.mxu0 0.0
        %322 = vmatpush2.msra.mxu0 0.0
        %323 = vmatprep.subr.mxu0 0.0
        %324 = vmatpush2.msra.mxu0 0.0
        %325 = vmatprep.subr.mxu0 0.0
        %326 = vmatpush2.msra.mxu0 0.0
        %327 = vmatprep.subr.mxu0 0.0
        %328 = vmatpush2.msra.mxu0 0.0
        %329 = vmatprep.subr.mxu0 0.0
        %330 = vmatpush2.msra.mxu0 0.0
        %331 = vmatprep.subr.mxu0 0.0
        %332 = vmatpush2.msra.mxu0 0.0
        %333 = vmatprep.mubr.f32.mxu0 0.0
        %334 = vmatmul.mubr.f32.gmra.mxu0 %v264
        %v335 = vpop.f32.mrf.mxu0
        %v336 = vadd.f32 %v255, %v335
        %v337 = vpop.f32.mrf.mxu0
        %v338 = vadd.f32 %v259, %v337
        %339 = vmatprep.mubr.f32.mxu0 0.0
        %340 = vmatmul.mubr.f32.gmra.mxu0 %v267
        %v341 = vpop.f32.mrf.mxu0
        %v342 = vadd.f32 %v255, %v341
        %v343 = vpop.f32.mrf.mxu0
        %v344 = vadd.f32 %v259, %v343
        %345 = vdwg.mxu0
        %v346 = vmul.f32 %v338, 0.5
        %v347 = vmul.f32 %v344, 0.5
        %v348 = vmul.f32 %v346, 1.442695
        %v349 = vpow.pop %v348
        %v350 = vmul.f32 %v347, 1.442695
        %v351 = vpow.pop %v350
        %v352 = vld [vmem:[%s202] sm:$0xff]
        %v353 = vld [vmem:[%s202 + $0x8] sm:$0xff]
        %v354 = vmul.f32 %v349, %v352
        %v355 = vmul.f32 %v351, %v353
        %v356 = vadd.f32 %v336, %v354
        %v357 = vadd.f32 %v342, %v355
        %358 = vst [vmem:[%s231] sm:$0xff] %v356
        %359 = vst [vmem:[%s231 + $0x18] sm:$0xff] %v357
        %360 = vst [vmem:[%s231 + $0x8] sm:$0xff] %v336
        %361 = vst [vmem:[%s231 + $0x20] sm:$0xff] %v342
        %362 = vst [vmem:[%s231 + $0x10] sm:$0xff] %v338
        %363 = vst [vmem:[%s231 + $0x28] sm:$0xff] %v344
        %s364 = sand.u32 %s123, 1
        %s365 = scalar_lea.sflag [#allocation4], %s364
        %s366 = sand.u32 %s123, 1
        %s367 = smul.addr %s366, 48
        %s368 = scalar_lea.vmem [#allocation5], %s367
        // Predicated region
        $region41: #{tpu_custom_call.1} parent=35 // pred_check
          %p369 = pneg %p133
        $region42: #{tpu_custom_call.1} parent=35 // pred_check_branch
          %371 = sbr.rel (%p369) target = $region44
        $region43: #{tpu_custom_call.1} parent=35 // pred_region
          %s372 = smul.u32 2, %s21
          %s374 = ssub.s32 768, 768
          %375 = vsyncadd %s365, %s374
          %s376 = smul.addr %s372, 3
          %s377 = smul.addr %s376, 128
          %s378 = scalar_lea.hbm %s4, %s377
          %s379 = sshll.u32 %s368, 4
          %s380 = int_to_ptr.vmem [resolvable:$true] %s379
          %385 = dma.vmem_to_hbm [thread:$0]  %s380, 768, %s378, %s365, 384, 384, 24
        $region44: #{tpu_custom_call.1} parent=35 // pred_fallthru
          _
      $region36: #{tpu_custom_call.1} parent=5 // pred_fallthru
        _
      %p386 = scmp.le.s32.totalorder 2, %s16
      // Predicated region
      $region45: #{tpu_custom_call.1} parent=5 // pred_check
        %p387 = pneg %p386
      $region46: #{tpu_custom_call.1} parent=5 // pred_check_branch
        %389 = sbr.rel (%p387) target = $region48
      $region47: #{tpu_custom_call.1} parent=5 // pred_region
        %s390 = ssub.s32 %s16, 2
        // Predicated region
        $region49: #{tpu_custom_call.1} parent=47 // pred_check
          %p391 = pneg %p139
        $region50: #{tpu_custom_call.1} parent=47 // pred_check_branch
          %393 = sbr.rel (%p391) target = $region52
        $region51: #{tpu_custom_call.1} parent=47 // pred_region
          %s394 = sand.u32 %s124, 1
          %s395 = scalar_lea.sflag [#allocation4], %s394
          %s396 = sand.u32 %s124, 1
          %s397 = smul.addr %s396, 48
          %s398 = scalar_lea.vmem [#allocation5], %s397
          %399 = dma.done %s395, 768
        $region52: #{tpu_custom_call.1} parent=47 // pred_fallthru
          _
      $region48: #{tpu_custom_call.1} parent=5 // pred_fallthru
        _
    $region6: #{tpu_custom_call.1} parent=1 // loop_footer
      %s20 = sadd.s32 1, %s16
    $region7: #{tpu_custom_call.1} parent=1 // loop_footer_branch
      %15 = sbr.rel target = $region3
    $region8: #{tpu_custom_call.1} parent=1 // loop_exit
      _
    %400 = vsyncpa [#allocation3], 1
    %s401 = scalar_lea.sflag [#allocation3], 1
    %402 = vsyncpa %s401, 1
    %403 = vsyncpa [#allocation4], 1
    %s404 = scalar_lea.sflag [#allocation4], 1
    %405 = vsyncpa %s404, 1

</llo_original>
